<compile_context>
chip_gen: v7x
topology: tpu7x:2x2x1
jax: 0.10.0
libtpu: 0.0.40
codegen_flags: <defaults>
</compile_context>

<pallas_src>
import functools

import jax
import jax.numpy as jnp
from jax.experimental import pallas as pl
from jax.experimental.pallas import tpu as pltpu

BN_EPS = 1e-5
LANE = 128
SUBLANE = 8
TILE_B = 128          # batch tile (rows per grid step); multiple of 128 for v5e MXU


def _round_up(n, m):
    return ((n + m - 1) // m) * m


# ----------------------------------------------------------------------------
# Kernel: one (TILE_B, D) activation tile per grid step; weights VMEM-resident.
# ----------------------------------------------------------------------------
def lost_cities_kernel(x_ref, w_ref, b_ref, out_ref):
    x = x_ref[...]                      # (TILE_B, D) f32

    # Static slices into the packed parameter buffers (free; no extra DMAs).
    w1 = w_ref[0]                       # (D, D) bf16  fc1 with bn1 folded in
    w2 = w_ref[1]                       # (D, D) bf16  fc2 with bn2 folded in
    w3 = w_ref[2]                       # (D, D) bf16  fc3 with bn3 folded in
    wh = w_ref[3]                       # (D, D) bf16  [policy | value] fused head
    b1 = b_ref[0:1, :]                  # (1, D) f32
    b2 = b_ref[1:2, :]
    b3 = b_ref[2:3, :]
    bh = b_ref[3:4, :]

    # Layer 1: relu(bn1(fc1(x)))                     (bn folded into w1/b1)
    h1 = jnp.maximum(
        jnp.dot(x.astype(jnp.bfloat16), w1,
                preferred_element_type=jnp.float32) + b1, 0.0)
    # Layer 2: relu(bn2(fc2(h1)) + h1)
    h2 = jnp.maximum(
        jnp.dot(h1.astype(jnp.bfloat16), w2,
                preferred_element_type=jnp.float32) + b2 + h1, 0.0)
    # Layer 3: relu(bn3(fc3(h2)) + h2)
    h3 = jnp.maximum(
        jnp.dot(h2.astype(jnp.bfloat16), w3,
                preferred_element_type=jnp.float32) + b3 + h2, 0.0)

    # Fused heads: lane-dense output slab (cols [0:A)=policy, col A=value).
    out_ref[...] = (
        jnp.dot(h3.astype(jnp.bfloat16), wh,
                preferred_element_type=jnp.float32) + bh
    )


# ----------------------------------------------------------------------------
# One-time parameter packing (BN fold + pad + bf16 cast). NOT on the hot path.
# ----------------------------------------------------------------------------
def _fold_bn(w, b, gamma, beta, mean, var):
    """Fold eval-mode BatchNorm1d into the preceding Linear (exact, in f32)."""
    scale = gamma * jax.lax.rsqrt(var + BN_EPS)     # (1, H)
    return w * scale, (b - mean) * scale + beta


def pack_params(params, *, state_size, action_size, hidden_size):
    """Pack all layer params into one bf16 weight slab and one f32 bias slab.

    Call once per weight update; pass the results into lost_cities_forward.
    """
    D = max(_round_up(state_size, LANE),
            _round_up(hidden_size, LANE),
            _round_up(action_size + 1, LANE))

    w1, b1 = _fold_bn(params["w1"], params["b1"], params["g1"],
                      params["be1"], params["m1"], params["v1"])
    w2, b2 = _fold_bn(params["w2"], params["b2"], params["g2"],
                      params["be2"], params["m2"], params["v2"])
    w3, b3 = _fold_bn(params["w3"], params["b3"], params["g3"],
                      params["be3"], params["m3"], params["v3"])
    wh = jnp.concatenate([params["wp"], params["wv"]], axis=1)   # (H, A+1)
    bh = jnp.concatenate([params["bp"], params["bv"]], axis=1)   # (1, A+1)

    def pad_w(w):
        full = jnp.zeros((D, D), jnp.float32).at[: w.shape[0], : w.shape[1]].set(w)
        return full.astype(jnp.bfloat16)

    def pad_b(b):
        return jnp.zeros((D,), jnp.float32).at[: b.shape[1]].set(b[0])

    w_packed = jnp.stack([pad_w(w1), pad_w(w2), pad_w(w3), pad_w(wh)])  # (4,D,D) bf16
    b_packed = jnp.zeros((SUBLANE, D), jnp.float32).at[:4].set(
        jnp.stack([pad_b(b1), pad_b(b2), pad_b(b3), pad_b(bh)]))        # (8,D) f32
    return w_packed, b_packed, D


# ----------------------------------------------------------------------------
# Hot-path forward: pad batch, one pallas_call with a parallel batch grid axis.
# ----------------------------------------------------------------------------
def lost_cities_forward(x, w_packed, b_packed, *, state_size, action_size,
                        tile_b=TILE_B):
    B = x.shape[0]
    D = w_packed.shape[1]
    Bp = _round_up(max(B, tile_b), tile_b)
    x_pad = jnp.zeros((Bp, D), jnp.float32).at[:B, :state_size].set(x)

    n_tiles = Bp // tile_b
    flops = 2 * Bp * D * D * 4
    bytes_accessed = (4 * (Bp * D * 2 + SUBLANE * D)      # x, out, biases (f32)
                      + 2 * 4 * D * D)                     # packed weights (bf16)

    out = pl.pallas_call(
        lost_cities_kernel,
        out_shape=jax.ShapeDtypeStruct((Bp, D), jnp.float32),
        grid=(n_tiles,),
        in_specs=[
            pl.BlockSpec((tile_b, D), lambda i: (i, 0)),       # x tile
            pl.BlockSpec((4, D, D), lambda i: (0, 0, 0)),      # weights, resident
            pl.BlockSpec((SUBLANE, D), lambda i: (0, 0)),      # biases, resident
        ],
        out_specs=pl.BlockSpec((tile_b, D), lambda i: (i, 0)),
        compiler_params=pltpu.CompilerParams(
            dimension_semantics=("parallel",)),
        cost_estimate=pl.CostEstimate(flops=flops, transcendentals=0,
                                      bytes_accessed=bytes_accessed),
    )(x_pad, w_packed, b_packed)

    policy = out[:B, :action_size]
    value = out[:B, action_size:action_size + 1]
    return policy, value


# ----------------------------------------------------------------------------
# Parameter init (mirrors the PyTorch module; weights stored (in, out)).
# ----------------------------------------------------------------------------
def _orthogonal(key, rows, cols):
    big, small = max(rows, cols), min(rows, cols)
    a = jax.random.normal(key, (big, small), dtype=jnp.float32)
    q, r = jnp.linalg.qr(a)
    q = q * jnp.sign(jnp.diagonal(r))
    if rows < cols:
        q = q.T
    return q[:rows, :cols]


def init_params(key, state_size, action_size, hidden_size):
    ks = jax.random.split(key, 22)

    def linear(kw, kb, fan_in, fan_out):
        bound = 1.0 / jnp.sqrt(jnp.float32(fan_in))
        w = jax.random.uniform(kw, (fan_in, fan_out), jnp.float32, -bound, bound)
        b = jax.random.uniform(kb, (1, fan_out), jnp.float32, -bound, bound)
        return w, b

    w1, b1 = linear(ks[0], ks[1], state_size, hidden_size)
    w2, b2 = linear(ks[2], ks[3], hidden_size, hidden_size)
    w3, b3 = linear(ks[4], ks[5], hidden_size, hidden_size)

    # policy head: orthogonal init (PyTorch stores (A, H); we store (H, A))
    wp = _orthogonal(ks[6], action_size, hidden_size).T
    bound = 1.0 / jnp.sqrt(jnp.float32(hidden_size))
    bp = jax.random.uniform(ks[7], (1, action_size), jnp.float32, -bound, bound)
    wv, bv = linear(ks[8], ks[9], hidden_size, 1)

    # Non-trivial BN params / running stats (independent keys) so the BN fold
    # is actually exercised by the test.
    def bn_params(kg, kb2, km, kv, h):
        gamma = jax.random.uniform(kg, (1, h), jnp.float32, 0.5, 1.5)
        beta = 0.1 * jax.random.normal(kb2, (1, h), jnp.float32)
        mean = 0.1 * jax.random.normal(km, (1, h), jnp.float32)
        var = jax.random.uniform(kv, (1, h), jnp.float32, 0.5, 1.5)
        return gamma, beta, mean, var

    g1, be1, m1, v1 = bn_params(ks[10], ks[11], ks[12], ks[13], hidden_size)
    g2, be2, m2, v2 = bn_params(ks[14], ks[15], ks[16], ks[17], hidden_size)
    g3, be3, m3, v3 = bn_params(ks[18], ks[19], ks[20], ks[21], hidden_size)

    return dict(
        w1=w1, b1=b1, g1=g1, be1=be1, m1=m1, v1=v1,
        w2=w2, b2=b2, g2=g2, be2=be2, m2=m2, v2=v2,
        w3=w3, b3=b3, g3=g3, be3=be3, m3=m3, v3=v3,
        wp=wp, bp=bp, wv=wv, bv=bv,
    )


def reference_forward(x, p):
    """Pure-JAX f32 reference of the eval-mode forward (unfused, unpadded)."""
    def bn(y, g, b, m, v):
        return (y - m) * (g / jnp.sqrt(v + BN_EPS)) + b
    h1 = jax.nn.relu(bn(x @ p["w1"] + p["b1"], p["g1"], p["be1"], p["m1"], p["v1"]))
    h2 = jax.nn.relu(bn(h1 @ p["w2"] + p["b2"], p["g2"], p["be2"], p["m2"], p["v2"]) + h1)
    h3 = jax.nn.relu(bn(h2 @ p["w3"] + p["b3"], p["g3"], p["be3"], p["m3"], p["v3"]) + h2)
    return h3 @ p["wp"] + p["bp"], h3 @ p["wv"] + p["bv"]


if __name__ == "__main__":
    B, STATE, ACTION, HIDDEN = 8, 24, 16, 32

    key = jax.random.PRNGKey(0)
    k_x, k_p = jax.random.split(key)
    x = jax.random.normal(k_x, (B, STATE), dtype=jnp.float32)
    params = init_params(k_p, STATE, ACTION, HIDDEN)

    # Pack once, outside the per-forward path (BN fold + pad + bf16 cast).
    w_packed, b_packed, _ = pack_params(
        params, state_size=STATE, action_size=ACTION, hidden_size=HIDDEN)
    w_packed, b_packed = jax.block_until_ready((w_packed, b_packed))

    fwd = jax.jit(functools.partial(
        lost_cities_forward, state_size=STATE, action_size=ACTION))
    policy, value = fwd(x, w_packed, b_packed)
    jax.block_until_ready((policy, value))

    ref_policy, ref_value = reference_forward(x, params)
    assert policy.shape == (B, ACTION) and value.shape == (B, 1)
    # bf16 weights vs f32 reference -> loosen tolerance (review-approved ~1e-2).
    assert jnp.allclose(policy, ref_policy, atol=3e-2, rtol=3e-2)
    assert jnp.allclose(value, ref_value, atol=3e-2, rtol=3e-2)

    print("KERNEL_OK")
</pallas_src>

<mosaic_0001>
module attributes {stable_mosaic.version = 11 : i64} {
  func.func @lost_cities_kernel(%arg0: i32, %arg1: memref<128x128xf32, #tpu.memory_space<vmem>>, %arg2: memref<4x128x128xbf16, #tpu.memory_space<vmem>>, %arg3: memref<8x128xf32, #tpu.memory_space<vmem>>, %arg4: memref<128x128xf32, #tpu.memory_space<vmem>>) attributes {dimension_semantics = [#tpu.dimension_semantics<parallel>], iteration_bounds = array<i64: 1>, scalar_prefetch = 0 : i64, scratch_operands = 0 : i64, tpu.core_type = #tpu.core_type<tc>, window_params = [{transform_indices = @transform_0, window_bounds = array<i64: 128, 128>}, {pipeline_mode = #tpu.pipeline_mode<synchronous>, transform_indices = @transform_1, window_bounds = array<i64: 4, 128, 128>}, {pipeline_mode = #tpu.pipeline_mode<synchronous>, transform_indices = @transform_2, window_bounds = array<i64: 8, 128>}, {transform_indices = @transform_3, window_bounds = array<i64: 128, 128>}]} {
    %c0 = arith.constant 0 : index
    %c0_0 = arith.constant 0 : index
    %0 = vector.load %arg1[%c0, %c0_0] : memref<128x128xf32, #tpu.memory_space<vmem>>, vector<128x128xf32>
    %c0_1 = arith.constant 0 : index
    %c0_2 = arith.constant 0 : index
    %c0_3 = arith.constant 0 : index
    %1 = vector.load %arg2[%c0_1, %c0_2, %c0_3] : memref<4x128x128xbf16, #tpu.memory_space<vmem>>, vector<1x128x128xbf16>
    %2 = vector.shape_cast %1 : vector<1x128x128xbf16> to vector<128x128xbf16>
    %c1 = arith.constant 1 : index
    %c0_4 = arith.constant 0 : index
    %c0_5 = arith.constant 0 : index
    %3 = vector.load %arg2[%c1, %c0_4, %c0_5] : memref<4x128x128xbf16, #tpu.memory_space<vmem>>, vector<1x128x128xbf16>
    %4 = vector.shape_cast %3 : vector<1x128x128xbf16> to vector<128x128xbf16>
    %c2 = arith.constant 2 : index
    %c0_6 = arith.constant 0 : index
    %c0_7 = arith.constant 0 : index
    %5 = vector.load %arg2[%c2, %c0_6, %c0_7] : memref<4x128x128xbf16, #tpu.memory_space<vmem>>, vector<1x128x128xbf16>
    %6 = vector.shape_cast %5 : vector<1x128x128xbf16> to vector<128x128xbf16>
    %c3 = arith.constant 3 : index
    %c0_8 = arith.constant 0 : index
    %c0_9 = arith.constant 0 : index
    %7 = vector.load %arg2[%c3, %c0_8, %c0_9] : memref<4x128x128xbf16, #tpu.memory_space<vmem>>, vector<1x128x128xbf16>
    %8 = vector.shape_cast %7 : vector<1x128x128xbf16> to vector<128x128xbf16>
    %c0_10 = arith.constant 0 : index
    %c0_11 = arith.constant 0 : index
    %9 = vector.load %arg3[%c0_10, %c0_11] : memref<8x128xf32, #tpu.memory_space<vmem>>, vector<1x128xf32>
    %c1_12 = arith.constant 1 : index
    %c0_13 = arith.constant 0 : index
    %10 = vector.load %arg3[%c1_12, %c0_13] : memref<8x128xf32, #tpu.memory_space<vmem>>, vector<1x128xf32>
    %c2_14 = arith.constant 2 : index
    %c0_15 = arith.constant 0 : index
    %11 = vector.load %arg3[%c2_14, %c0_15] : memref<8x128xf32, #tpu.memory_space<vmem>>, vector<1x128xf32>
    %c3_16 = arith.constant 3 : index
    %c0_17 = arith.constant 0 : index
    %12 = vector.load %arg3[%c3_16, %c0_17] : memref<8x128xf32, #tpu.memory_space<vmem>>, vector<1x128xf32>
    %13 = arith.truncf %0 : vector<128x128xf32> to vector<128x128xbf16>
    %cst = arith.constant dense<0.000000e+00> : vector<128x128xf32>
    %14 = tpu.matmul %13, %2, %cst {dimension_numbers = #tpu.dot_dimension_numbers<[1], [0], [0], [1], [0, 0, 1, 1], [], []>} : vector<128x128xbf16>, vector<128x128xbf16>, vector<128x128xf32> -> vector<128x128xf32>
    %15 = vector.broadcast %9 : vector<1x128xf32> to vector<128x128xf32>
    %16 = arith.addf %14, %15 : vector<128x128xf32>
    %cst_18 = arith.constant 0.000000e+00 : f32
    %17 = vector.broadcast %cst_18 : f32 to vector<128x128xf32>
    %18 = arith.maximumf %16, %17 : vector<128x128xf32>
    %19 = arith.truncf %18 : vector<128x128xf32> to vector<128x128xbf16>
    %cst_19 = arith.constant dense<0.000000e+00> : vector<128x128xf32>
    %20 = tpu.matmul %19, %4, %cst_19 {dimension_numbers = #tpu.dot_dimension_numbers<[1], [0], [0], [1], [0, 0, 1, 1], [], []>} : vector<128x128xbf16>, vector<128x128xbf16>, vector<128x128xf32> -> vector<128x128xf32>
    %21 = vector.broadcast %10 : vector<1x128xf32> to vector<128x128xf32>
    %22 = arith.addf %20, %21 : vector<128x128xf32>
    %23 = arith.addf %22, %18 : vector<128x128xf32>
    %cst_20 = arith.constant 0.000000e+00 : f32
    %24 = vector.broadcast %cst_20 : f32 to vector<128x128xf32>
    %25 = arith.maximumf %23, %24 : vector<128x128xf32>
    %26 = arith.truncf %25 : vector<128x128xf32> to vector<128x128xbf16>
    %cst_21 = arith.constant dense<0.000000e+00> : vector<128x128xf32>
    %27 = tpu.matmul %26, %6, %cst_21 {dimension_numbers = #tpu.dot_dimension_numbers<[1], [0], [0], [1], [0, 0, 1, 1], [], []>} : vector<128x128xbf16>, vector<128x128xbf16>, vector<128x128xf32> -> vector<128x128xf32>
    %28 = vector.broadcast %11 : vector<1x128xf32> to vector<128x128xf32>
    %29 = arith.addf %27, %28 : vector<128x128xf32>
    %30 = arith.addf %29, %25 : vector<128x128xf32>
    %cst_22 = arith.constant 0.000000e+00 : f32
    %31 = vector.broadcast %cst_22 : f32 to vector<128x128xf32>
    %32 = arith.maximumf %30, %31 : vector<128x128xf32>
    %33 = arith.truncf %32 : vector<128x128xf32> to vector<128x128xbf16>
    %cst_23 = arith.constant dense<0.000000e+00> : vector<128x128xf32>
    %34 = tpu.matmul %33, %8, %cst_23 {dimension_numbers = #tpu.dot_dimension_numbers<[1], [0], [0], [1], [0, 0, 1, 1], [], []>} : vector<128x128xbf16>, vector<128x128xbf16>, vector<128x128xf32> -> vector<128x128xf32>
    %35 = vector.broadcast %12 : vector<1x128xf32> to vector<128x128xf32>
    %36 = arith.addf %34, %35 : vector<128x128xf32>
    %c0_24 = arith.constant 0 : index
    %c0_25 = arith.constant 0 : index
    %37 = vector.load %arg4[%c0_24, %c0_25] : memref<128x128xf32, #tpu.memory_space<vmem>>, vector<128x128xf32>
    tpu.vector_store %arg4[%c0_24, %c0_25], %36 {strides = array<i32>} : memref<128x128xf32, #tpu.memory_space<vmem>>, vector<128x128xf32>,
    return
  }
  func.func @transform_0(%arg0: i32) -> (i32, i32) {
    %c0_i32 = arith.constant 0 : i32
    %c0_i32_0 = arith.constant 0 : i32
    return %arg0, %c0_i32 : i32, i32
  }
  func.func @transform_1(%arg0: i32) -> (i32, i32, i32) {
    %c0_i32 = arith.constant 0 : i32
    %c0_i32_0 = arith.constant 0 : i32
    %c0_i32_1 = arith.constant 0 : i32
    %c0_i32_2 = arith.constant 0 : i32
    return %c0_i32, %c0_i32_0, %c0_i32_1 : i32, i32, i32
  }
  func.func @transform_2(%arg0: i32) -> (i32, i32) {
    %c0_i32 = arith.constant 0 : i32
    %c0_i32_0 = arith.constant 0 : i32
    %c0_i32_1 = arith.constant 0 : i32
    return %c0_i32, %c0_i32_0 : i32, i32
  }
  func.func @transform_3(%arg0: i32) -> (i32, i32) {
    %c0_i32 = arith.constant 0 : i32
    %c0_i32_0 = arith.constant 0 : i32
    return %arg0, %c0_i32 : i32, i32
  }
}

</mosaic_0001>

<llo_original>
// kernel: lost_cities_forward.1
$region0: #{lost_cities_forward.1}
  #allocation0 [shape = 'u32[]', space=smem, size = 0x4, offset = 0x4, fixed_abs, tag = 'smem constant byte address 0x4 - core index']
  #allocation1 [shape = 'u32[144,128]{1,0:T(1,128)}', space=vmem, size = 0x12000, scoped, tag = 'internal scratch']
  %s0 = inlined_call_operand.vmem [shape: f32[128,128], index: 0, kind: input, shape index: {}]
  %s1 = inlined_call_operand.hbm [shape: bf16[4,128,128], index: 1, kind: input, shape index: {}]
  %s2 = inlined_call_operand.vmem [shape: f32[8,128], index: 2, kind: input, shape index: {}]
  %s3 = inlined_call_operand.vmem [shape: f32[128,128], index: 3, kind: output, shape index: {}]
  %s4 = sld [smem:[#allocation0]]
  $region26: #{lost_cities_forward.1} parent=0
    _
  %s6 = ssub.s32 1, %s4
  %s7 = scalar_select 0, %s6, %s4
  $region1: #{lost_cities_forward.1} parent=0
    #allocation2 [shape = 'u8[131072]{0}', space=vmem, size = 0x20000, scoped, tag = 'input window, operand 1, single buffered']
    #allocation3 [shape = 's32[1]{0}', space=sflag, size = 0x4, scoped, tag = 'scoped memory for lost_cities_forward.1']
    %8 = vsyncpa [#allocation3], 0
    // Predicated region
    $region2: #{lost_cities_forward.1} parent=1 // pred_check
      _
    $region3: #{lost_cities_forward.1} parent=1 // pred_check_branch
      %10 = sbr.rel (0) target = $region5
    $region4: #{lost_cities_forward.1} parent=1 // pred_region
      _
    $region5: #{lost_cities_forward.1} parent=1 // pred_fallthru
      _
    // Predicated region
    $region6: #{lost_cities_forward.1} parent=1 // pred_check
      _
    $region7: #{lost_cities_forward.1} parent=1 // pred_check_branch
      %12 = sbr.rel (0) target = $region9
    $region8: #{lost_cities_forward.1} parent=1 // pred_region
      %s14 = ssub.s32 4096, 4096
      %15 = vsyncadd [#allocation3], %s14
      %s16 = sshll.u32 [#allocation2], 4
      %s17 = int_to_ptr.vmem [resolvable:$true] %s16
      %22 = dma.hbm_to_vmem [thread:$0]  %s1, 4096, %s17, [#allocation3], 64, 64, 4
    $region9: #{lost_cities_forward.1} parent=1 // pred_fallthru
      _
    // Predicated region
    $region10: #{lost_cities_forward.1} parent=1 // pred_check
      _
    $region11: #{lost_cities_forward.1} parent=1 // pred_check_branch
      %24 = sbr.rel (0) target = $region13
    $region12: #{lost_cities_forward.1} parent=1 // pred_region
      _
    $region13: #{lost_cities_forward.1} parent=1 // pred_fallthru
      _
    // Predicated region
    $region14: #{lost_cities_forward.1} parent=1 // pred_check
      _
    $region15: #{lost_cities_forward.1} parent=1 // pred_check_branch
      %26 = sbr.rel (0) target = $region17
    $region16: #{lost_cities_forward.1} parent=1 // pred_region
      %27 = dma.done [#allocation3], 4096
    $region17: #{lost_cities_forward.1} parent=1 // pred_fallthru
      _
    %v29 = vld [vmem:[%s0] sm:$0xff]
    %v30 = vld [vmem:[%s0 + $0x8] sm:$0xff]
    %v31 = vld [vmem:[%s0 + $0x10] sm:$0xff]
    %v32 = vld [vmem:[%s0 + $0x18] sm:$0xff]
    %v33 = vld [vmem:[%s0 + $0x20] sm:$0xff]
    %v34 = vld [vmem:[%s0 + $0x28] sm:$0xff]
    %v35 = vld [vmem:[%s0 + $0x30] sm:$0xff]
    %v36 = vld [vmem:[%s0 + $0x38] sm:$0xff]
    %v37 = vld [vmem:[%s0 + $0x40] sm:$0xff]
    %v38 = vld [vmem:[%s0 + $0x48] sm:$0xff]
    %v39 = vld [vmem:[%s0 + $0x50] sm:$0xff]
    %v40 = vld [vmem:[%s0 + $0x58] sm:$0xff]
    %v41 = vld [vmem:[%s0 + $0x60] sm:$0xff]
    %v42 = vld [vmem:[%s0 + $0x68] sm:$0xff]
    %v43 = vld [vmem:[%s0 + $0x70] sm:$0xff]
    %v44 = vld [vmem:[%s0 + $0x78] sm:$0xff]
    %v45 = vld [vmem:[#allocation2] sm:$0xf]
    %v46 = vld [vmem:[#allocation2 + $0x4] sm:$0xf]
    %v47 = vld [vmem:[#allocation2 + $0x8] sm:$0xf]
    %v48 = vld [vmem:[#allocation2 + $0xc] sm:$0xf]
    %v49 = vld [vmem:[#allocation2 + $0x10] sm:$0xf]
    %v50 = vld [vmem:[#allocation2 + $0x14] sm:$0xf]
    %v51 = vld [vmem:[#allocation2 + $0x18] sm:$0xf]
    %v52 = vld [vmem:[#allocation2 + $0x1c] sm:$0xf]
    %v53 = vld [vmem:[#allocation2 + $0x20] sm:$0xf]
    %v54 = vld [vmem:[#allocation2 + $0x24] sm:$0xf]
    %v55 = vld [vmem:[#allocation2 + $0x28] sm:$0xf]
    %v56 = vld [vmem:[#allocation2 + $0x2c] sm:$0xf]
    %v57 = vld [vmem:[#allocation2 + $0x30] sm:$0xf]
    %v58 = vld [vmem:[#allocation2 + $0x34] sm:$0xf]
    %v59 = vld [vmem:[#allocation2 + $0x38] sm:$0xf]
    %v60 = vld [vmem:[#allocation2 + $0x3c] sm:$0xf]
    %s61 = scalar_lea.vmem [#allocation2], 64
    %v62 = vld [vmem:[%s61] sm:$0xf]
    %v63 = vld [vmem:[%s61 + $0x4] sm:$0xf]
    %v64 = vld [vmem:[%s61 + $0x8] sm:$0xf]
    %v65 = vld [vmem:[%s61 + $0xc] sm:$0xf]
    %v66 = vld [vmem:[%s61 + $0x10] sm:$0xf]
    %v67 = vld [vmem:[%s61 + $0x14] sm:$0xf]
    %v68 = vld [vmem:[%s61 + $0x18] sm:$0xf]
    %v69 = vld [vmem:[%s61 + $0x1c] sm:$0xf]
    %v70 = vld [vmem:[%s61 + $0x20] sm:$0xf]
    %v71 = vld [vmem:[%s61 + $0x24] sm:$0xf]
    %v72 = vld [vmem:[%s61 + $0x28] sm:$0xf]
    %v73 = vld [vmem:[%s61 + $0x2c] sm:$0xf]
    %v74 = vld [vmem:[%s61 + $0x30] sm:$0xf]
    %v75 = vld [vmem:[%s61 + $0x34] sm:$0xf]
    %v76 = vld [vmem:[%s61 + $0x38] sm:$0xf]
    %v77 = vld [vmem:[%s61 + $0x3c] sm:$0xf]
    %s78 = scalar_lea.vmem [#allocation2], 128
    %v79 = vld [vmem:[%s78] sm:$0xf]
    %v80 = vld [vmem:[%s78 + $0x4] sm:$0xf]
    %v81 = vld [vmem:[%s78 + $0x8] sm:$0xf]
    %v82 = vld [vmem:[%s78 + $0xc] sm:$0xf]
    %v83 = vld [vmem:[%s78 + $0x10] sm:$0xf]
    %v84 = vld [vmem:[%s78 + $0x14] sm:$0xf]
    %v85 = vld [vmem:[%s78 + $0x18] sm:$0xf]
    %v86 = vld [vmem:[%s78 + $0x1c] sm:$0xf]
    %v87 = vld [vmem:[%s78 + $0x20] sm:$0xf]
    %v88 = vld [vmem:[%s78 + $0x24] sm:$0xf]
    %v89 = vld [vmem:[%s78 + $0x28] sm:$0xf]
    %v90 = vld [vmem:[%s78 + $0x2c] sm:$0xf]
    %v91 = vld [vmem:[%s78 + $0x30] sm:$0xf]
    %v92 = vld [vmem:[%s78 + $0x34] sm:$0xf]
    %v93 = vld [vmem:[%s78 + $0x38] sm:$0xf]
    %v94 = vld [vmem:[%s78 + $0x3c] sm:$0xf]
    %s95 = scalar_lea.vmem [#allocation2], 192
    %v96 = vld [vmem:[%s95] sm:$0xf]
    %v97 = vld [vmem:[%s95 + $0x4] sm:$0xf]
    %v98 = vld [vmem:[%s95 + $0x8] sm:$0xf]
    %v99 = vld [vmem:[%s95 + $0xc] sm:$0xf]
    %v100 = vld [vmem:[%s95 + $0x10] sm:$0xf]
    %v101 = vld [vmem:[%s95 + $0x14] sm:$0xf]
    %v102 = vld [vmem:[%s95 + $0x18] sm:$0xf]
    %v103 = vld [vmem:[%s95 + $0x1c] sm:$0xf]
    %v104 = vld [vmem:[%s95 + $0x20] sm:$0xf]
    %v105 = vld [vmem:[%s95 + $0x24] sm:$0xf]
    %v106 = vld [vmem:[%s95 + $0x28] sm:$0xf]
    %v107 = vld [vmem:[%s95 + $0x2c] sm:$0xf]
    %v108 = vld [vmem:[%s95 + $0x30] sm:$0xf]
    %v109 = vld [vmem:[%s95 + $0x34] sm:$0xf]
    %v110 = vld [vmem:[%s95 + $0x38] sm:$0xf]
    %v111 = vld [vmem:[%s95 + $0x3c] sm:$0xf]
    %v112 = vld [vmem:[%s2] sm:$0x1]
    %v113 = vld [vmem:[%s2 + $0x1] sm:$0x1]
    %v114 = vld [vmem:[%s2 + $0x2] sm:$0x1]
    %v115 = vld [vmem:[%s2 + $0x3] sm:$0x1]
    %v116 = vpack.c.bf16 %v30, %v29
    %v117 = vpack.c.bf16 %v32, %v31
    %v118 = vpack.c.bf16 %v34, %v33
    %v119 = vpack.c.bf16 %v36, %v35
    %v120 = vpack.c.bf16 %v38, %v37
    %v121 = vpack.c.bf16 %v40, %v39
    %v122 = vpack.c.bf16 %v42, %v41
    %v123 = vpack.c.bf16 %v44, %v43
    %v124 = vlaneseq
    %v125 = vshrl.u32 %v124, 7
    %v126 = vsub.s32 0, %v125
    %v127 = vrot.slane %v112, %v126
    %v144 = vunpack.c.l.b16 %v45
    %v145 = vunpack.c.l.b16 %v46
    %v146 = vunpack.c.l.b16 %v47
    %v147 = vunpack.c.l.b16 %v48
    %v148 = vunpack.c.l.b16 %v49
    %v149 = vunpack.c.l.b16 %v50
    %v150 = vunpack.c.l.b16 %v51
    %v151 = vunpack.c.l.b16 %v52
    %v152 = vunpack.c.l.b16 %v53
    %v153 = vunpack.c.l.b16 %v54
    %v154 = vunpack.c.l.b16 %v55
    %v155 = vunpack.c.l.b16 %v56
    %v156 = vunpack.c.l.b16 %v57
    %v157 = vunpack.c.l.b16 %v58
    %v158 = vunpack.c.l.b16 %v59
    %v159 = vunpack.c.l.b16 %v60
    %v160 = vpack.c.b16 %v145, %v144
    %v161 = vpack.c.b16 %v147, %v146
    %v162 = vpack.c.b16 %v149, %v148
    %v163 = vpack.c.b16 %v151, %v150
    %v164 = vpack.c.b16 %v153, %v152
    %v165 = vpack.c.b16 %v155, %v154
    %v166 = vpack.c.b16 %v157, %v156
    %v167 = vpack.c.b16 %v159, %v158
    %176 = vmatprep.subr.bf16.mxu0 0
    %177 = vmatpush1.bf16.msra.mxu0 %v160
    %178 = vmatprep.subr.bf16.mxu0 0
    %179 = vmatpush1.bf16.msra.mxu0 %v161
    %180 = vmatprep.subr.bf16.mxu0 0
    %181 = vmatpush1.bf16.msra.mxu0 %v162
    %182 = vmatprep.subr.bf16.mxu0 0
    %183 = vmatpush1.bf16.msra.mxu0 %v163
    %184 = vmatprep.subr.bf16.mxu0 0
    %185 = vmatpush1.bf16.msra.mxu0 %v164
    %186 = vmatprep.subr.bf16.mxu0 0
    %187 = vmatpush1.bf16.msra.mxu0 %v165
    %188 = vmatprep.subr.bf16.mxu0 0
    %189 = vmatpush1.bf16.msra.mxu0 %v166
    %190 = vmatprep.subr.bf16.mxu0 0
    %191 = vmatpush1.bf16.msra.mxu0 %v167
    %192 = vmatprep.subr.bf16.mxu0 0
    %193 = vmatpush1.bf16.msra.mxu0 0
    %194 = vmatprep.subr.bf16.mxu0 0
    %195 = vmatpush1.bf16.msra.mxu0 0
    %196 = vmatprep.subr.bf16.mxu0 0
    %197 = vmatpush1.bf16.msra.mxu0 0
    %198 = vmatprep.subr.bf16.mxu0 0
    %199 = vmatpush1.bf16.msra.mxu0 0
    %200 = vmatprep.subr.bf16.mxu0 0
    %201 = vmatpush1.bf16.msra.mxu0 0
    %202 = vmatprep.subr.bf16.mxu0 0
    %203 = vmatpush1.bf16.msra.mxu0 0
    %204 = vmatprep.subr.bf16.mxu0 0
    %205 = vmatpush1.bf16.msra.mxu0 0
    %206 = vmatprep.subr.bf16.mxu0 0
    %207 = vmatpush1.bf16.msra.mxu0 0
    %208 = vmatprep.mubr.bf16.mxu0 0
    %209 = vmatmul.mubr.bf16.gmra.mrb[0].mxu0 %v116
    %v210 = vpop.f32.mrb[0].mxu0
    %v211 = vadd.f32 %v127, %v210
    %v212 = vpop.f32.mrb[0].mxu0
    %v213 = vpop.f32.mrb[0].mxu0
    %v214 = vadd.f32 %v127, %v213
    %v215 = vpop.f32.mrb[0].mxu0
    %216 = vmatprep.mubr.bf16.mxu0 0
    %217 = vmatmul.mubr.bf16.gmra.mrb[0].mxu0 %v117
    %v218 = vpop.f32.mrb[0].mxu0
    %v219 = vadd.f32 %v127, %v218
    %v220 = vpop.f32.mrb[0].mxu0
    %v221 = vpop.f32.mrb[0].mxu0
    %v222 = vadd.f32 %v127, %v221
    %v223 = vpop.f32.mrb[0].mxu0
    %224 = vmatprep.mubr.bf16.mxu0 0
    %225 = vmatmul.mubr.bf16.gmra.mrb[0].mxu0 %v118
    %v226 = vpop.f32.mrb[0].mxu0
    %v227 = vadd.f32 %v127, %v226
    %v228 = vpop.f32.mrb[0].mxu0
    %v229 = vpop.f32.mrb[0].mxu0
    %v230 = vadd.f32 %v127, %v229
    %v231 = vpop.f32.mrb[0].mxu0
    %232 = vmatprep.mubr.bf16.mxu0 0
    %233 = vmatmul.mubr.bf16.gmra.mrb[0].mxu0 %v119
    %v234 = vpop.f32.mrb[0].mxu0
    %v235 = vadd.f32 %v127, %v234
    %v236 = vpop.f32.mrb[0].mxu0
    %v237 = vpop.f32.mrb[0].mxu0
    %v238 = vadd.f32 %v127, %v237
    %v239 = vpop.f32.mrb[0].mxu0
    %240 = vmatprep.mubr.bf16.mxu0 0
    %241 = vmatmul.mubr.bf16.gmra.mrb[0].mxu0 %v120
    %v242 = vpop.f32.mrb[0].mxu0
    %v243 = vadd.f32 %v127, %v242
    %v244 = vpop.f32.mrb[0].mxu0
    %v245 = vpop.f32.mrb[0].mxu0
    %v246 = vadd.f32 %v127, %v245
    %v247 = vpop.f32.mrb[0].mxu0
    %248 = vmatprep.mubr.bf16.mxu0 0
    %249 = vmatmul.mubr.bf16.gmra.mrb[0].mxu0 %v121
    %v250 = vpop.f32.mrb[0].mxu0
    %v251 = vadd.f32 %v127, %v250
    %v252 = vpop.f32.mrb[0].mxu0
    %v253 = vpop.f32.mrb[0].mxu0
    %v254 = vadd.f32 %v127, %v253
    %v255 = vpop.f32.mrb[0].mxu0
    %256 = vmatprep.mubr.bf16.mxu0 0
    %257 = vmatmul.mubr.bf16.gmra.mrb[0].mxu0 %v122
    %v258 = vpop.f32.mrb[0].mxu0
    %v259 = vadd.f32 %v127, %v258
    %v260 = vpop.f32.mrb[0].mxu0
    %v261 = vpop.f32.mrb[0].mxu0
    %v262 = vadd.f32 %v127, %v261
    %v263 = vpop.f32.mrb[0].mxu0
    %264 = vmatprep.mubr.bf16.mxu0 0
    %265 = vmatmul.mubr.bf16.gmra.mrb[0].mxu0 %v123
    %v266 = vpop.f32.mrb[0].mxu0
    %v267 = vadd.f32 %v127, %v266
    %v268 = vpop.f32.mrb[0].mxu0
    %v269 = vpop.f32.mrb[0].mxu0
    %v270 = vadd.f32 %v127, %v269
    %v271 = vpop.f32.mrb[0].mxu0
    %272 = vdwg.mxu0
    %v273 = vmax.f32 %v211, 0.0
    %v274 = vmax.f32 %v214, 0.0
    %v275 = vmax.f32 %v219, 0.0
    %v276 = vmax.f32 %v222, 0.0
    %v277 = vmax.f32 %v227, 0.0
    %v278 = vmax.f32 %v230, 0.0
    %v279 = vmax.f32 %v235, 0.0
    %v280 = vmax.f32 %v238, 0.0
    %v281 = vmax.f32 %v243, 0.0
    %v282 = vmax.f32 %v246, 0.0
    %v283 = vmax.f32 %v251, 0.0
    %v284 = vmax.f32 %v254, 0.0
    %v285 = vmax.f32 %v259, 0.0
    %v286 = vmax.f32 %v262, 0.0
    %v287 = vmax.f32 %v267, 0.0
    %v288 = vmax.f32 %v270, 0.0
    %v289 = vpack.c.bf16 %v274, %v273
    %v290 = vpack.c.bf16 %v276, %v275
    %v291 = vpack.c.bf16 %v278, %v277
    %v292 = vpack.c.bf16 %v280, %v279
    %v293 = vpack.c.bf16 %v282, %v281
    %v294 = vpack.c.bf16 %v284, %v283
    %v295 = vpack.c.bf16 %v286, %v285
    %v296 = vpack.c.bf16 %v288, %v287
    %v297 = vlaneseq
    %v298 = vshrl.u32 %v297, 7
    %v299 = vsub.s32 0, %v298
    %v300 = vrot.slane %v113, %v299
    %v317 = vunpack.c.l.b16 %v62
    %v318 = vunpack.c.l.b16 %v63
    %v319 = vunpack.c.l.b16 %v64
    %v320 = vunpack.c.l.b16 %v65
    %v321 = vunpack.c.l.b16 %v66
    %v322 = vunpack.c.l.b16 %v67
    %v323 = vunpack.c.l.b16 %v68
    %v324 = vunpack.c.l.b16 %v69
    %v325 = vunpack.c.l.b16 %v70
    %v326 = vunpack.c.l.b16 %v71
    %v327 = vunpack.c.l.b16 %v72
    %v328 = vunpack.c.l.b16 %v73
    %v329 = vunpack.c.l.b16 %v74
    %v330 = vunpack.c.l.b16 %v75
    %v331 = vunpack.c.l.b16 %v76
    %v332 = vunpack.c.l.b16 %v77
    %v333 = vpack.c.b16 %v318, %v317
    %v334 = vpack.c.b16 %v320, %v319
    %v335 = vpack.c.b16 %v322, %v321
    %v336 = vpack.c.b16 %v324, %v323
    %v337 = vpack.c.b16 %v326, %v325
    %v338 = vpack.c.b16 %v328, %v327
    %v339 = vpack.c.b16 %v330, %v329
    %v340 = vpack.c.b16 %v332, %v331
    %349 = vmatprep.subr.bf16.mxu0 0
    %350 = vmatpush1.bf16.msra.mxu0 %v333
    %351 = vmatprep.subr.bf16.mxu0 0
    %352 = vmatpush1.bf16.msra.mxu0 %v334
    %353 = vmatprep.subr.bf16.mxu0 0
    %354 = vmatpush1.bf16.msra.mxu0 %v335
    %355 = vmatprep.subr.bf16.mxu0 0
    %356 = vmatpush1.bf16.msra.mxu0 %v336
    %357 = vmatprep.subr.bf16.mxu0 0
    %358 = vmatpush1.bf16.msra.mxu0 %v337
    %359 = vmatprep.subr.bf16.mxu0 0
    %360 = vmatpush1.bf16.msra.mxu0 %v338
    %361 = vmatprep.subr.bf16.mxu0 0
    %362 = vmatpush1.bf16.msra.mxu0 %v339
    %363 = vmatprep.subr.bf16.mxu0 0
    %364 = vmatpush1.bf16.msra.mxu0 %v340
    %365 = vmatprep.subr.bf16.mxu0 0
    %366 = vmatpush1.bf16.msra.mxu0 0
    %367 = vmatprep.subr.bf16.mxu0 0
    %368 = vmatpush1.bf16.msra.mxu0 0
    %369 = vmatprep.subr.bf16.mxu0 0
    %370 = vmatpush1.bf16.msra.mxu0 0
    %371 = vmatprep.subr.bf16.mxu0 0
    %372 = vmatpush1.bf16.msra.mxu0 0
    %373 = vmatprep.subr.bf16.mxu0 0
    %374 = vmatpush1.bf16.msra.mxu0 0
    %375 = vmatprep.subr.bf16.mxu0 0
    %376 = vmatpush1.bf16.msra.mxu0 0
    %377 = vmatprep.subr.bf16.mxu0 0
    %378 = vmatpush1.bf16.msra.mxu0 0
    %379 = vmatprep.subr.bf16.mxu0 0
    %380 = vmatpush1.bf16.msra.mxu0 0
    %381 = vmatprep.mubr.bf16.mxu0 0
    %382 = vmatmul.mubr.bf16.gmra.mrb[0].mxu0 %v289
    %v383 = vpop.f32.mrb[0].mxu0
    %v384 = vadd.f32 %v300, %v383
    %v385 = vpop.f32.mrb[0].mxu0
    %v386 = vpop.f32.mrb[0].mxu0
    %v387 = vadd.f32 %v300, %v386
    %v388 = vpop.f32.mrb[0].mxu0
    %389 = vmatprep.mubr.bf16.mxu0 0
    %390 = vmatmul.mubr.bf16.gmra.mrb[0].mxu0 %v290
    %v391 = vpop.f32.mrb[0].mxu0
    %v392 = vadd.f32 %v300, %v391
    %v393 = vpop.f32.mrb[0].mxu0
    %v394 = vpop.f32.mrb[0].mxu0
    %v395 = vadd.f32 %v300, %v394
    %v396 = vpop.f32.mrb[0].mxu0
    %397 = vmatprep.mubr.bf16.mxu0 0
    %398 = vmatmul.mubr.bf16.gmra.mrb[0].mxu0 %v291
    %v399 = vpop.f32.mrb[0].mxu0
    %v400 = vadd.f32 %v300, %v399
    %v401 = vpop.f32.mrb[0].mxu0
    %v402 = vpop.f32.mrb[0].mxu0
    %v403 = vadd.f32 %v300, %v402
    %v404 = vpop.f32.mrb[0].mxu0
    %405 = vmatprep.mubr.bf16.mxu0 0
    %406 = vmatmul.mubr.bf16.gmra.mrb[0].mxu0 %v292
    %v407 = vpop.f32.mrb[0].mxu0
    %v408 = vadd.f32 %v300, %v407
    %v409 = vpop.f32.mrb[0].mxu0
    %v410 = vpop.f32.mrb[0].mxu0
    %v411 = vadd.f32 %v300, %v410
    %v412 = vpop.f32.mrb[0].mxu0
    %413 = vmatprep.mubr.bf16.mxu0 0
    %414 = vmatmul.mubr.bf16.gmra.mrb[0].mxu0 %v293
    %v415 = vpop.f32.mrb[0].mxu0
    %v416 = vadd.f32 %v300, %v415
    %v417 = vpop.f32.mrb[0].mxu0
    %v418 = vpop.f32.mrb[0].mxu0
    %v419 = vadd.f32 %v300, %v418
    %v420 = vpop.f32.mrb[0].mxu0
    %421 = vmatprep.mubr.bf16.mxu0 0
    %422 = vmatmul.mubr.bf16.gmra.mrb[0].mxu0 %v294
    %v423 = vpop.f32.mrb[0].mxu0
    %v424 = vadd.f32 %v300, %v423
    %v425 = vpop.f32.mrb[0].mxu0
    %v426 = vpop.f32.mrb[0].mxu0
    %v427 = vadd.f32 %v300, %v426
    %v428 = vpop.f32.mrb[0].mxu0
    %429 = vmatprep.mubr.bf16.mxu0 0
    %430 = vmatmul.mubr.bf16.gmra.mrb[0].mxu0 %v295
    %v431 = vpop.f32.mrb[0].mxu0
    %v432 = vadd.f32 %v300, %v431
    %v433 = vpop.f32.mrb[0].mxu0
    %v434 = vpop.f32.mrb[0].mxu0
    %v435 = vadd.f32 %v300, %v434
    %v436 = vpop.f32.mrb[0].mxu0
    %437 = vmatprep.mubr.bf16.mxu0 0
    %438 = vmatmul.mubr.bf16.gmra.mrb[0].mxu0 %v296
    %v439 = vpop.f32.mrb[0].mxu0
    %v440 = vadd.f32 %v300, %v439
    %v441 = vpop.f32.mrb[0].mxu0
    %v442 = vpop.f32.mrb[0].mxu0
    %v443 = vadd.f32 %v300, %v442
    %v444 = vpop.f32.mrb[0].mxu0
    %445 = vdwg.mxu0
    %v446 = vadd.f32 %v384, %v273
    %v447 = vadd.f32 %v387, %v274
    %v448 = vadd.f32 %v392, %v275
    %v449 = vadd.f32 %v395, %v276
    %v450 = vadd.f32 %v400, %v277
    %v451 = vadd.f32 %v403, %v278
    %v452 = vadd.f32 %v408, %v279
    %v453 = vadd.f32 %v411, %v280
    %v454 = vadd.f32 %v416, %v281
    %v455 = vadd.f32 %v419, %v282
    %v456 = vadd.f32 %v424, %v283
    %v457 = vadd.f32 %v427, %v284
    %v458 = vadd.f32 %v432, %v285
    %v459 = vadd.f32 %v435, %v286
    %v460 = vadd.f32 %v440, %v287
    %v461 = vadd.f32 %v443, %v288
    %v462 = vmax.f32 %v446, 0.0
    %v463 = vmax.f32 %v447, 0.0
    %v464 = vmax.f32 %v448, 0.0
    %v465 = vmax.f32 %v449, 0.0
    %v466 = vmax.f32 %v450, 0.0
    %v467 = vmax.f32 %v451, 0.0
    %v468 = vmax.f32 %v452, 0.0
    %v469 = vmax.f32 %v453, 0.0
    %v470 = vmax.f32 %v454, 0.0
    %v471 = vmax.f32 %v455, 0.0
    %v472 = vmax.f32 %v456, 0.0
    %v473 = vmax.f32 %v457, 0.0
    %v474 = vmax.f32 %v458, 0.0
    %v475 = vmax.f32 %v459, 0.0
    %v476 = vmax.f32 %v460, 0.0
    %v477 = vmax.f32 %v461, 0.0
    %v478 = vpack.c.bf16 %v463, %v462
    %v479 = vpack.c.bf16 %v465, %v464
    %v480 = vpack.c.bf16 %v467, %v466
    %v481 = vpack.c.bf16 %v469, %v468
    %v482 = vpack.c.bf16 %v471, %v470
    %v483 = vpack.c.bf16 %v473, %v472
    %v484 = vpack.c.bf16 %v475, %v474
    %v485 = vpack.c.bf16 %v477, %v476
    %v486 = vlaneseq
    %v487 = vshrl.u32 %v486, 7
    %v488 = vsub.s32 0, %v487
    %v489 = vrot.slane %v114, %v488
    %v506 = vunpack.c.l.b16 %v79
    %v507 = vunpack.c.l.b16 %v80
    %v508 = vunpack.c.l.b16 %v81
    %v509 = vunpack.c.l.b16 %v82
    %v510 = vunpack.c.l.b16 %v83
    %v511 = vunpack.c.l.b16 %v84
    %v512 = vunpack.c.l.b16 %v85
    %v513 = vunpack.c.l.b16 %v86
    %v514 = vunpack.c.l.b16 %v87
    %v515 = vunpack.c.l.b16 %v88
    %v516 = vunpack.c.l.b16 %v89
    %v517 = vunpack.c.l.b16 %v90
    %v518 = vunpack.c.l.b16 %v91
    %v519 = vunpack.c.l.b16 %v92
    %v520 = vunpack.c.l.b16 %v93
    %v521 = vunpack.c.l.b16 %v94
    %v522 = vpack.c.b16 %v507, %v506
    %v523 = vpack.c.b16 %v509, %v508
    %v524 = vpack.c.b16 %v511, %v510
    %v525 = vpack.c.b16 %v513, %v512
    %v526 = vpack.c.b16 %v515, %v514
    %v527 = vpack.c.b16 %v517, %v516
    %v528 = vpack.c.b16 %v519, %v518
    %v529 = vpack.c.b16 %v521, %v520
    %538 = vmatprep.subr.bf16.mxu0 0
    %539 = vmatpush1.bf16.msra.mxu0 %v522
    %540 = vmatprep.subr.bf16.mxu0 0
    %541 = vmatpush1.bf16.msra.mxu0 %v523
    %542 = vmatprep.subr.bf16.mxu0 0
    %543 = vmatpush1.bf16.msra.mxu0 %v524
    %544 = vmatprep.subr.bf16.mxu0 0
    %545 = vmatpush1.bf16.msra.mxu0 %v525
    %546 = vmatprep.subr.bf16.mxu0 0
    %547 = vmatpush1.bf16.msra.mxu0 %v526
    %548 = vmatprep.subr.bf16.mxu0 0
    %549 = vmatpush1.bf16.msra.mxu0 %v527
    %550 = vmatprep.subr.bf16.mxu0 0
    %551 = vmatpush1.bf16.msra.mxu0 %v528
    %552 = vmatprep.subr.bf16.mxu0 0
    %553 = vmatpush1.bf16.msra.mxu0 %v529
    %554 = vmatprep.subr.bf16.mxu0 0
    %555 = vmatpush1.bf16.msra.mxu0 0
    %556 = vmatprep.subr.bf16.mxu0 0
    %557 = vmatpush1.bf16.msra.mxu0 0
    %558 = vmatprep.subr.bf16.mxu0 0
    %559 = vmatpush1.bf16.msra.mxu0 0
    %560 = vmatprep.subr.bf16.mxu0 0
    %561 = vmatpush1.bf16.msra.mxu0 0
    %562 = vmatprep.subr.bf16.mxu0 0
    %563 = vmatpush1.bf16.msra.mxu0 0
    %564 = vmatprep.subr.bf16.mxu0 0
    %565 = vmatpush1.bf16.msra.mxu0 0
    %566 = vmatprep.subr.bf16.mxu0 0
    %567 = vmatpush1.bf16.msra.mxu0 0
    %568 = vmatprep.subr.bf16.mxu0 0
    %569 = vmatpush1.bf16.msra.mxu0 0
    %570 = vmatprep.mubr.bf16.mxu0 0
    %571 = vmatmul.mubr.bf16.gmra.mrb[0].mxu0 %v478
    %v572 = vpop.f32.mrb[0].mxu0
    %v573 = vadd.f32 %v489, %v572
    %v574 = vpop.f32.mrb[0].mxu0
    %v575 = vpop.f32.mrb[0].mxu0
    %v576 = vadd.f32 %v489, %v575
    %v577 = vpop.f32.mrb[0].mxu0
    %578 = vmatprep.mubr.bf16.mxu0 0
    %579 = vmatmul.mubr.bf16.gmra.mrb[0].mxu0 %v479
    %v580 = vpop.f32.mrb[0].mxu0
    %v581 = vadd.f32 %v489, %v580
    %v582 = vpop.f32.mrb[0].mxu0
    %v583 = vpop.f32.mrb[0].mxu0
    %v584 = vadd.f32 %v489, %v583
    %v585 = vpop.f32.mrb[0].mxu0
    %586 = vmatprep.mubr.bf16.mxu0 0
    %587 = vmatmul.mubr.bf16.gmra.mrb[0].mxu0 %v480
    %v588 = vpop.f32.mrb[0].mxu0
    %v589 = vadd.f32 %v489, %v588
    %v590 = vpop.f32.mrb[0].mxu0
    %v591 = vpop.f32.mrb[0].mxu0
    %v592 = vadd.f32 %v489, %v591
    %v593 = vpop.f32.mrb[0].mxu0
    %594 = vmatprep.mubr.bf16.mxu0 0
    %595 = vmatmul.mubr.bf16.gmra.mrb[0].mxu0 %v481
    %v596 = vpop.f32.mrb[0].mxu0
    %v597 = vadd.f32 %v489, %v596
    %v598 = vpop.f32.mrb[0].mxu0
    %v599 = vpop.f32.mrb[0].mxu0
    %v600 = vadd.f32 %v489, %v599
    %v601 = vpop.f32.mrb[0].mxu0
    %602 = vmatprep.mubr.bf16.mxu0 0
    %603 = vmatmul.mubr.bf16.gmra.mrb[0].mxu0 %v482
    %v604 = vpop.f32.mrb[0].mxu0
    %v605 = vadd.f32 %v489, %v604
    %v606 = vpop.f32.mrb[0].mxu0
    %v607 = vpop.f32.mrb[0].mxu0
    %v608 = vadd.f32 %v489, %v607
    %v609 = vpop.f32.mrb[0].mxu0
    %610 = vmatprep.mubr.bf16.mxu0 0
    %611 = vmatmul.mubr.bf16.gmra.mrb[0].mxu0 %v483
    %v612 = vpop.f32.mrb[0].mxu0
    %v613 = vadd.f32 %v489, %v612
    %v614 = vpop.f32.mrb[0].mxu0
    %v615 = vpop.f32.mrb[0].mxu0
    %v616 = vadd.f32 %v489, %v615
    %v617 = vpop.f32.mrb[0].mxu0
    %618 = vmatprep.mubr.bf16.mxu0 0
    %619 = vmatmul.mubr.bf16.gmra.mrb[0].mxu0 %v484
    %v620 = vpop.f32.mrb[0].mxu0
    %v621 = vadd.f32 %v489, %v620
    %v622 = vpop.f32.mrb[0].mxu0
    %v623 = vpop.f32.mrb[0].mxu0
    %v624 = vadd.f32 %v489, %v623
    %v625 = vpop.f32.mrb[0].mxu0
    %626 = vmatprep.mubr.bf16.mxu0 0
    %627 = vmatmul.mubr.bf16.gmra.mrb[0].mxu0 %v485
    %v628 = vpop.f32.mrb[0].mxu0
    %v629 = vadd.f32 %v489, %v628
    %v630 = vpop.f32.mrb[0].mxu0
    %v631 = vpop.f32.mrb[0].mxu0
    %v632 = vadd.f32 %v489, %v631
    %v633 = vpop.f32.mrb[0].mxu0
    %634 = vdwg.mxu0
    %v635 = vadd.f32 %v573, %v462
    %v636 = vadd.f32 %v576, %v463
    %v637 = vadd.f32 %v581, %v464
    %v638 = vadd.f32 %v584, %v465
    %v639 = vadd.f32 %v589, %v466
    %v640 = vadd.f32 %v592, %v467
    %v641 = vadd.f32 %v597, %v468
    %v642 = vadd.f32 %v600, %v469
    %v643 = vadd.f32 %v605, %v470
    %v644 = vadd.f32 %v608, %v471
    %v645 = vadd.f32 %v613, %v472
    %v646 = vadd.f32 %v616, %v473
    %v647 = vadd.f32 %v621, %v474
    %v648 = vadd.f32 %v624, %v475
    %v649 = vadd.f32 %v629, %v476
    %v650 = vadd.f32 %v632, %v477
    %v651 = vmax.f32 %v635, 0.0
    %v652 = vmax.f32 %v636, 0.0
    %v653 = vmax.f32 %v637, 0.0
    %v654 = vmax.f32 %v638, 0.0
    %v655 = vmax.f32 %v639, 0.0
    %v656 = vmax.f32 %v640, 0.0
    %v657 = vmax.f32 %v641, 0.0
    %v658 = vmax.f32 %v642, 0.0
    %v659 = vmax.f32 %v643, 0.0
    %v660 = vmax.f32 %v644, 0.0
    %v661 = vmax.f32 %v645, 0.0
    %v662 = vmax.f32 %v646, 0.0
    %v663 = vmax.f32 %v647, 0.0
    %v664 = vmax.f32 %v648, 0.0
    %v665 = vmax.f32 %v649, 0.0
    %v666 = vmax.f32 %v650, 0.0
    %v667 = vpack.c.bf16 %v652, %v651
    %v668 = vpack.c.bf16 %v654, %v653
    %v669 = vpack.c.bf16 %v656, %v655
    %v670 = vpack.c.bf16 %v658, %v657
    %v671 = vpack.c.bf16 %v660, %v659
    %v672 = vpack.c.bf16 %v662, %v661
    %v673 = vpack.c.bf16 %v664, %v663
    %v674 = vpack.c.bf16 %v666, %v665
    %v675 = vlaneseq
    %v676 = vshrl.u32 %v675, 7
    %v677 = vsub.s32 0, %v676
    %v678 = vrot.slane %v115, %v677
    %v695 = vunpack.c.l.b16 %v96
    %v696 = vunpack.c.l.b16 %v97
    %v697 = vunpack.c.l.b16 %v98
    %v698 = vunpack.c.l.b16 %v99
    %v699 = vunpack.c.l.b16 %v100
    %v700 = vunpack.c.l.b16 %v101
    %v701 = vunpack.c.l.b16 %v102
    %v702 = vunpack.c.l.b16 %v103
    %v703 = vunpack.c.l.b16 %v104
    %v704 = vunpack.c.l.b16 %v105
    %v705 = vunpack.c.l.b16 %v106
    %v706 = vunpack.c.l.b16 %v107
    %v707 = vunpack.c.l.b16 %v108
    %v708 = vunpack.c.l.b16 %v109
    %v709 = vunpack.c.l.b16 %v110
    %v710 = vunpack.c.l.b16 %v111
    %v711 = vpack.c.b16 %v696, %v695
    %v712 = vpack.c.b16 %v698, %v697
    %v713 = vpack.c.b16 %v700, %v699
    %v714 = vpack.c.b16 %v702, %v701
    %v715 = vpack.c.b16 %v704, %v703
    %v716 = vpack.c.b16 %v706, %v705
    %v717 = vpack.c.b16 %v708, %v707
    %v718 = vpack.c.b16 %v710, %v709
    %727 = vmatprep.subr.bf16.mxu0 0
    %728 = vmatpush1.bf16.msra.mxu0 %v711
    %729 = vmatprep.subr.bf16.mxu0 0
    %730 = vmatpush1.bf16.msra.mxu0 %v712
    %731 = vmatprep.subr.bf16.mxu0 0
    %732 = vmatpush1.bf16.msra.mxu0 %v713
    %733 = vmatprep.subr.bf16.mxu0 0
    %734 = vmatpush1.bf16.msra.mxu0 %v714
    %735 = vmatprep.subr.bf16.mxu0 0
    %736 = vmatpush1.bf16.msra.mxu0 %v715
    %737 = vmatprep.subr.bf16.mxu0 0
    %738 = vmatpush1.bf16.msra.mxu0 %v716
    %739 = vmatprep.subr.bf16.mxu0 0
    %740 = vmatpush1.bf16.msra.mxu0 %v717
    %741 = vmatprep.subr.bf16.mxu0 0
    %742 = vmatpush1.bf16.msra.mxu0 %v718
    %743 = vmatprep.subr.bf16.mxu0 0
    %744 = vmatpush1.bf16.msra.mxu0 0
    %745 = vmatprep.subr.bf16.mxu0 0
    %746 = vmatpush1.bf16.msra.mxu0 0
    %747 = vmatprep.subr.bf16.mxu0 0
    %748 = vmatpush1.bf16.msra.mxu0 0
    %749 = vmatprep.subr.bf16.mxu0 0
    %750 = vmatpush1.bf16.msra.mxu0 0
    %751 = vmatprep.subr.bf16.mxu0 0
    %752 = vmatpush1.bf16.msra.mxu0 0
    %753 = vmatprep.subr.bf16.mxu0 0
    %754 = vmatpush1.bf16.msra.mxu0 0
    %755 = vmatprep.subr.bf16.mxu0 0
    %756 = vmatpush1.bf16.msra.mxu0 0
    %757 = vmatprep.subr.bf16.mxu0 0
    %758 = vmatpush1.bf16.msra.mxu0 0
    %759 = vmatprep.mubr.bf16.mxu0 0
    %760 = vmatmul.mubr.bf16.gmra.mrb[0].mxu0 %v667
    %v761 = vpop.f32.mrb[0].mxu0
    %v762 = vadd.f32 %v678, %v761
    %v763 = vpop.f32.mrb[0].mxu0
    %v764 = vpop.f32.mrb[0].mxu0
    %v765 = vadd.f32 %v678, %v764
    %v766 = vpop.f32.mrb[0].mxu0
    %767 = vmatprep.mubr.bf16.mxu0 0
    %768 = vmatmul.mubr.bf16.gmra.mrb[0].mxu0 %v668
    %v769 = vpop.f32.mrb[0].mxu0
    %v770 = vadd.f32 %v678, %v769
    %v771 = vpop.f32.mrb[0].mxu0
    %v772 = vpop.f32.mrb[0].mxu0
    %v773 = vadd.f32 %v678, %v772
    %v774 = vpop.f32.mrb[0].mxu0
    %775 = vmatprep.mubr.bf16.mxu0 0
    %776 = vmatmul.mubr.bf16.gmra.mrb[0].mxu0 %v669
    %v777 = vpop.f32.mrb[0].mxu0
    %v778 = vadd.f32 %v678, %v777
    %v779 = vpop.f32.mrb[0].mxu0
    %v780 = vpop.f32.mrb[0].mxu0
    %v781 = vadd.f32 %v678, %v780
    %v782 = vpop.f32.mrb[0].mxu0
    %783 = vmatprep.mubr.bf16.mxu0 0
    %784 = vmatmul.mubr.bf16.gmra.mrb[0].mxu0 %v670
    %v785 = vpop.f32.mrb[0].mxu0
    %v786 = vadd.f32 %v678, %v785
    %v787 = vpop.f32.mrb[0].mxu0
    %v788 = vpop.f32.mrb[0].mxu0
    %v789 = vadd.f32 %v678, %v788
    %v790 = vpop.f32.mrb[0].mxu0
    %791 = vmatprep.mubr.bf16.mxu0 0
    %792 = vmatmul.mubr.bf16.gmra.mrb[0].mxu0 %v671
    %v793 = vpop.f32.mrb[0].mxu0
    %v794 = vadd.f32 %v678, %v793
    %v795 = vpop.f32.mrb[0].mxu0
    %v796 = vpop.f32.mrb[0].mxu0
    %v797 = vadd.f32 %v678, %v796
    %v798 = vpop.f32.mrb[0].mxu0
    %799 = vmatprep.mubr.bf16.mxu0 0
    %800 = vmatmul.mubr.bf16.gmra.mrb[0].mxu0 %v672
    %v801 = vpop.f32.mrb[0].mxu0
    %v802 = vadd.f32 %v678, %v801
    %v803 = vpop.f32.mrb[0].mxu0
    %v804 = vpop.f32.mrb[0].mxu0
    %v805 = vadd.f32 %v678, %v804
    %v806 = vpop.f32.mrb[0].mxu0
    %807 = vmatprep.mubr.bf16.mxu0 0
    %808 = vmatmul.mubr.bf16.gmra.mrb[0].mxu0 %v673
    %v809 = vpop.f32.mrb[0].mxu0
    %v810 = vadd.f32 %v678, %v809
    %v811 = vpop.f32.mrb[0].mxu0
    %v812 = vpop.f32.mrb[0].mxu0
    %v813 = vadd.f32 %v678, %v812
    %v814 = vpop.f32.mrb[0].mxu0
    %815 = vmatprep.mubr.bf16.mxu0 0
    %816 = vmatmul.mubr.bf16.gmra.mrb[0].mxu0 %v674
    %v817 = vpop.f32.mrb[0].mxu0
    %v818 = vadd.f32 %v678, %v817
    %v819 = vpop.f32.mrb[0].mxu0
    %v820 = vpop.f32.mrb[0].mxu0
    %v821 = vadd.f32 %v678, %v820
    %v822 = vpop.f32.mrb[0].mxu0
    %823 = vdwg.mxu0
    %824 = vst [vmem:[%s3] sm:$0xff] %v762
    %825 = vst [vmem:[%s3 + $0x8] sm:$0xff] %v765
    %826 = vst [vmem:[%s3 + $0x10] sm:$0xff] %v770
    %827 = vst [vmem:[%s3 + $0x18] sm:$0xff] %v773
    %828 = vst [vmem:[%s3 + $0x20] sm:$0xff] %v778
    %829 = vst [vmem:[%s3 + $0x28] sm:$0xff] %v781
    %830 = vst [vmem:[%s3 + $0x30] sm:$0xff] %v786
    %831 = vst [vmem:[%s3 + $0x38] sm:$0xff] %v789
    %832 = vst [vmem:[%s3 + $0x40] sm:$0xff] %v794
    %833 = vst [vmem:[%s3 + $0x48] sm:$0xff] %v797
    %834 = vst [vmem:[%s3 + $0x50] sm:$0xff] %v802
    %835 = vst [vmem:[%s3 + $0x58] sm:$0xff] %v805
    %836 = vst [vmem:[%s3 + $0x60] sm:$0xff] %v810
    %837 = vst [vmem:[%s3 + $0x68] sm:$0xff] %v813
    %838 = vst [vmem:[%s3 + $0x70] sm:$0xff] %v818
    %839 = vst [vmem:[%s3 + $0x78] sm:$0xff] %v821
    // Predicated region
    $region18: #{lost_cities_forward.1} parent=1 // pred_check
      _
    $region19: #{lost_cities_forward.1} parent=1 // pred_check_branch
      %841 = sbr.rel (0) target = $region21
    $region20: #{lost_cities_forward.1} parent=1 // pred_region
      _
    $region21: #{lost_cities_forward.1} parent=1 // pred_fallthru
      _
    // Predicated region
    $region22: #{lost_cities_forward.1} parent=1 // pred_check
      _
    $region23: #{lost_cities_forward.1} parent=1 // pred_check_branch
      %843 = sbr.rel (0) target = $region25
    $region24: #{lost_cities_forward.1} parent=1 // pred_region
      _
    $region25: #{lost_cities_forward.1} parent=1 // pred_fallthru
      _
    %844 = vsyncpa [#allocation3], 1

</llo_original>
